<compile_context>
chip_gen: v5e
topology: v5e:2x2
jax: 0.10.0
libtpu: 0.0.40
codegen_flags: <defaults>
</compile_context>

<pallas_src>
import functools
import math

import jax
import jax.numpy as jnp
from jax.experimental import pallas as pl
from jax.experimental.pallas import tpu as pltpu


def _double_concat_kernel(*refs, col_sizes):
    """refs = (x0_ref, ..., x{n-1}_ref, out_ref); all 2D (rows_tile, cols).

    Writes 2*x_i directly into out_ref's static lane slice (no concatenate
    intermediate).  Column offsets are 128-aligned for the NCHW test case,
    giving dense unmasked stores.
    """
    out_ref = refs[-1]
    off = 0
    for i, size in enumerate(col_sizes):
        v = refs[i][...]                       # single vld stream per input
        out_ref[:, off:off + size] = v + v     # torch.add(x, x)
        off += size


def double_then_concat(xs, axis: int):
    """Pallas equivalent of ModelFromAnotherOp.forward with torch.cat(dim=axis)."""
    xs = list(xs)
    ndim = xs[0].ndim
    axis = axis % ndim

    # Follow jnp/torch dtype promotion (wrapper-side cast is free plumbing).
    out_dtype = jnp.result_type(*[x.dtype for x in xs])
    xs = [x.astype(out_dtype) for x in xs]

    # ---- Fold to 2D so the concat happens along the lane (last) axis. ----
    # rows = prod(dims before axis); cols_i = size_axis_i * prod(dims after).
    # Row-major layout makes concat(axis) identical to concat along the last
    # dim of these folded views, for ANY axis (handles last-two-dims case too).
    lead = tuple(int(d) for d in xs[0].shape[:axis])
    trail = tuple(int(d) for d in xs[0].shape[axis + 1:])
    rows = int(math.prod(lead))
    trail_sz = int(math.prod(trail))

    xs2d = [x.reshape(rows, int(x.shape[axis]) * trail_sz) for x in xs]
    col_sizes = tuple(int(x.shape[1]) for x in xs2d)
    total_cols = sum(col_sizes)
    itemsize = jnp.dtype(out_dtype).itemsize

    # ---- Row tiling (1-D grid). Keep double-buffered VMEM use <= ~8 MiB:
    # per step VMEM ~= 2 (double-buffer) * (sum input tiles + output tile)
    #               = 4 * rows_tile * total_cols * itemsize.
    # 8 MiB fits v5e's 16 MiB scoped default; v6e/v7x have >= 32 MiB scoped.
    vmem_budget = 8 * 1024 * 1024
    bytes_per_row = 2 * total_cols * itemsize            # inputs + output
    max_rows = max(1, vmem_budget // (2 * bytes_per_row))  # extra 2x: buffering
    if rows <= max_rows or rows < 8:
        # Single block per array (block_shape == full dims, always legal).
        # TODO(synk): if rows < 8 with huge cols ever matters, add column
        # tiling at 128-aligned boundaries per input.
        rows_tile = rows
    else:
        rows_tile = max(8, (min(rows, max_rows) // 8) * 8)  # multiple of 8
    grid = (pl.cdiv(rows, rows_tile),)

    # index_map returns BLOCK indices (Pallas multiplies by block_shape).
    in_specs = [pl.BlockSpec((rows_tile, c), lambda r: (r, 0)) for c in col_sizes]
    out_spec = pl.BlockSpec((rows_tile, total_cols), lambda r: (r, 0))

    total_in_elems = sum(int(x.size) for x in xs2d)
    cost = pl.CostEstimate(
        flops=total_in_elems,                    # one add per input element
        transcendentals=0,
        bytes_accessed=2 * total_in_elems * itemsize,  # read inputs + write out
    )

    out2d = pl.pallas_call(
        functools.partial(_double_concat_kernel, col_sizes=col_sizes),
        out_shape=jax.ShapeDtypeStruct((rows, total_cols), out_dtype),
        grid=grid,
        in_specs=in_specs,
        out_specs=out_spec,
        compiler_params=pltpu.CompilerParams(
            # Rows are independent: shard the grid across v7x's 2 TensorCores.
            dimension_semantics=("parallel",),
        ),
        cost_estimate=cost,
    )(*xs2d)

    out_shape = lead + (sum(int(x.shape[axis]) for x in xs),) + trail
    return out2d.reshape(out_shape)


def reference(xs, axis: int):
    return jnp.concatenate([x + x for x in xs], axis=axis)


if __name__ == "__main__":
    key = jax.random.PRNGKey(0)
    # 3 inputs, NCHW (2, 4, 16, 16), concatenated along channels (dim=1)
    # -> output (2, 12, 16, 16).
    shape = (2, 4, 16, 16)
    n_inputs = 3
    axis = 1

    keys = jax.random.split(key, n_inputs)
    xs = [jax.random.normal(k, shape, dtype=jnp.float32) for k in keys]

    out = double_then_concat(xs, axis)
    out = jax.block_until_ready(out)

    ref = reference(xs, axis)
    assert out.shape == ref.shape, (out.shape, ref.shape)
    assert out.dtype == ref.dtype, (out.dtype, ref.dtype)
    assert jnp.allclose(out, ref, atol=1e-6, rtol=1e-6), "mismatch vs reference"

    print("KERNEL_OK")
</pallas_src>

<mosaic_0001>
module attributes {stable_mosaic.version = 11 : i64} {
  func.func @_double_concat_kernel(%arg0: i32, %arg1: memref<2x1024xf32, #tpu.memory_space<vmem>>, %arg2: memref<2x1024xf32, #tpu.memory_space<vmem>>, %arg3: memref<2x1024xf32, #tpu.memory_space<vmem>>, %arg4: memref<2x3072xf32, #tpu.memory_space<vmem>>) attributes {dimension_semantics = [#tpu.dimension_semantics<parallel>], iteration_bounds = array<i64: 1>, scalar_prefetch = 0 : i64, scratch_operands = 0 : i64, tpu.core_type = #tpu.core_type<tc>, window_params = [{transform_indices = @transform_0, window_bounds = array<i64: 2, 1024>}, {transform_indices = @transform_1, window_bounds = array<i64: 2, 1024>}, {transform_indices = @transform_2, window_bounds = array<i64: 2, 1024>}, {transform_indices = @transform_3, window_bounds = array<i64: 2, 3072>}]} {
    %c0 = arith.constant 0 : index
    %c0_0 = arith.constant 0 : index
    %0 = vector.load %arg1[%c0, %c0_0] : memref<2x1024xf32, #tpu.memory_space<vmem>>, vector<2x1024xf32>
    %1 = arith.addf %0, %0 : vector<2x1024xf32>
    %c0_1 = arith.constant 0 : index
    %c0_2 = arith.constant 0 : index
    %2 = vector.load %arg4[%c0_1, %c0_2] : memref<2x3072xf32, #tpu.memory_space<vmem>>, vector<2x1024xf32>
    tpu.vector_store %arg4[%c0_1, %c0_2], %1 {strides = array<i32>} : memref<2x3072xf32, #tpu.memory_space<vmem>>, vector<2x1024xf32>,
    %c0_3 = arith.constant 0 : index
    %c0_4 = arith.constant 0 : index
    %3 = vector.load %arg2[%c0_3, %c0_4] : memref<2x1024xf32, #tpu.memory_space<vmem>>, vector<2x1024xf32>
    %4 = arith.addf %3, %3 : vector<2x1024xf32>
    %c0_5 = arith.constant 0 : index
    %c1024 = arith.constant 1024 : index
    %5 = vector.load %arg4[%c0_5, %c1024] : memref<2x3072xf32, #tpu.memory_space<vmem>>, vector<2x1024xf32>
    tpu.vector_store %arg4[%c0_5, %c1024], %4 {strides = array<i32>} : memref<2x3072xf32, #tpu.memory_space<vmem>>, vector<2x1024xf32>,
    %c0_6 = arith.constant 0 : index
    %c0_7 = arith.constant 0 : index
    %6 = vector.load %arg3[%c0_6, %c0_7] : memref<2x1024xf32, #tpu.memory_space<vmem>>, vector<2x1024xf32>
    %7 = arith.addf %6, %6 : vector<2x1024xf32>
    %c0_8 = arith.constant 0 : index
    %c2048 = arith.constant 2048 : index
    %8 = vector.load %arg4[%c0_8, %c2048] : memref<2x3072xf32, #tpu.memory_space<vmem>>, vector<2x1024xf32>
    tpu.vector_store %arg4[%c0_8, %c2048], %7 {strides = array<i32>} : memref<2x3072xf32, #tpu.memory_space<vmem>>, vector<2x1024xf32>,
    return
  }
  func.func @transform_0(%arg0: i32) -> (i32, i32) {
    %c0_i32 = arith.constant 0 : i32
    %c0_i32_0 = arith.constant 0 : i32
    return %arg0, %c0_i32 : i32, i32
  }
  func.func @transform_1(%arg0: i32) -> (i32, i32) {
    %c0_i32 = arith.constant 0 : i32
    %c0_i32_0 = arith.constant 0 : i32
    return %arg0, %c0_i32 : i32, i32
  }
  func.func @transform_2(%arg0: i32) -> (i32, i32) {
    %c0_i32 = arith.constant 0 : i32
    %c0_i32_0 = arith.constant 0 : i32
    return %arg0, %c0_i32 : i32, i32
  }
  func.func @transform_3(%arg0: i32) -> (i32, i32) {
    %c0_i32 = arith.constant 0 : i32
    %c0_i32_0 = arith.constant 0 : i32
    return %arg0, %c0_i32 : i32, i32
  }
}

</mosaic_0001>

<llo_original>
// kernel: tpu_custom_call.1
$region0: #{tpu_custom_call.1}
  #allocation0 [shape = 'u32[]', space=smem, size = 0x4, offset = 0x4, fixed_abs, tag = 'smem constant byte address 0x4 - core index']
  #allocation1 [shape = 'u32[72,128]{1,0:T(1,128)}', space=vmem, size = 0x9000, scoped, tag = 'internal scratch']
  %s0 = inlined_call_operand.hbm [shape: f32[2,1024], index: 0, kind: input, shape index: {}]
  %s1 = inlined_call_operand.hbm [shape: f32[2,1024], index: 1, kind: input, shape index: {}]
  %s2 = inlined_call_operand.hbm [shape: f32[2,1024], index: 2, kind: input, shape index: {}]
  %s3 = inlined_call_operand.hbm [shape: f32[2,3072], index: 3, kind: output, shape index: {}]
  %s4 = sld [smem:[#allocation0]]
  $region34: #{tpu_custom_call.1} parent=0
    _
  %s6 = ssub.s32 1, %s4
  %s7 = scalar_select 0, %s6, %s4
  $region1: #{tpu_custom_call.1} parent=0
    #allocation2 [shape = 'u8[8192]{0}', space=vmem, size = 0x2000, scoped, tag = 'input window, operand 0, single buffered']
    #allocation3 [shape = 's32[1]{0}', space=sflag, size = 0x4, scoped, tag = 'scoped memory for tpu_custom_call.1']
    #allocation4 [shape = 's32[1]{0}', space=sflag, size = 0x4, scoped, tag = 'scoped memory for tpu_custom_call.1']
    #allocation5 [shape = 'u8[8192]{0}', space=vmem, size = 0x2000, scoped, tag = 'input window, operand 1, single buffered']
    #allocation6 [shape = 's32[1]{0}', space=sflag, size = 0x4, scoped, tag = 'scoped memory for tpu_custom_call.1']
    #allocation7 [shape = 'u8[8192]{0}', space=vmem, size = 0x2000, scoped, tag = 'input window, operand 2, single buffered']
    #allocation8 [shape = 'u8[24576]{0}', space=vmem, size = 0x6000, scoped, tag = 'output window, operand 0, single buffered']
    %8 = vsyncpa [#allocation3], 0
    %9 = vsyncpa [#allocation6], 0
    %10 = vsyncpa [#allocation4], 0
    // Predicated region
    $region2: #{tpu_custom_call.1} parent=1 // pred_check
      _
    $region3: #{tpu_custom_call.1} parent=1 // pred_check_branch
      %12 = sbr.rel (0) target = $region5
    $region4: #{tpu_custom_call.1} parent=1 // pred_region
      %14 = vsyncadd [#allocation3], 0
      %s16 = sshll.u32 %s0, 4
      %s17 = int_to_ptr.hbm [resolvable:$true] %s16
      %s18 = sshll.u32 [#allocation2], 4
      %s19 = int_to_ptr.vmem [resolvable:$true] %s18
      %21 = dma.hbm_to_vmem [thread:$0]  %s17, 256, %s19, [#allocation3]
    $region5: #{tpu_custom_call.1} parent=1 // pred_fallthru
      _
    // Predicated region
    $region6: #{tpu_custom_call.1} parent=1 // pred_check
      _
    $region7: #{tpu_custom_call.1} parent=1 // pred_check_branch
      %23 = sbr.rel (0) target = $region9
    $region8: #{tpu_custom_call.1} parent=1 // pred_region
      %25 = vsyncadd [#allocation6], 0
      %s27 = sshll.u32 %s1, 4
      %s28 = int_to_ptr.hbm [resolvable:$true] %s27
      %s29 = sshll.u32 [#allocation5], 4
      %s30 = int_to_ptr.vmem [resolvable:$true] %s29
      %32 = dma.hbm_to_vmem [thread:$0]  %s28, 256, %s30, [#allocation6]
    $region9: #{tpu_custom_call.1} parent=1 // pred_fallthru
      _
    // Predicated region
    $region10: #{tpu_custom_call.1} parent=1 // pred_check
      _
    $region11: #{tpu_custom_call.1} parent=1 // pred_check_branch
      %34 = sbr.rel (0) target = $region13
    $region12: #{tpu_custom_call.1} parent=1 // pred_region
      %36 = vsyncadd [#allocation6], 0
      %s38 = sshll.u32 %s2, 4
      %s39 = int_to_ptr.hbm [resolvable:$true] %s38
      %s40 = sshll.u32 [#allocation7], 4
      %s41 = int_to_ptr.vmem [resolvable:$true] %s40
      %43 = dma.hbm_to_vmem [thread:$0]  %s39, 256, %s41, [#allocation6]
    $region13: #{tpu_custom_call.1} parent=1 // pred_fallthru
      _
    // Predicated region
    $region14: #{tpu_custom_call.1} parent=1 // pred_check
      _
    $region15: #{tpu_custom_call.1} parent=1 // pred_check_branch
      %45 = sbr.rel (0) target = $region17
    $region16: #{tpu_custom_call.1} parent=1 // pred_region
      %47 = dma.done [#allocation3], 256
    $region17: #{tpu_custom_call.1} parent=1 // pred_fallthru
      _
    // Predicated region
    $region18: #{tpu_custom_call.1} parent=1 // pred_check
      _
    $region19: #{tpu_custom_call.1} parent=1 // pred_check_branch
      %49 = sbr.rel (0) target = $region21
    $region20: #{tpu_custom_call.1} parent=1 // pred_region
      %51 = dma.done [#allocation6], 256
    $region21: #{tpu_custom_call.1} parent=1 // pred_fallthru
      _
    // Predicated region
    $region22: #{tpu_custom_call.1} parent=1 // pred_check
      _
    $region23: #{tpu_custom_call.1} parent=1 // pred_check_branch
      %53 = sbr.rel (0) target = $region25
    $region24: #{tpu_custom_call.1} parent=1 // pred_region
      %55 = dma.done [#allocation6], 256
    $region25: #{tpu_custom_call.1} parent=1 // pred_fallthru
      _
    %v56 = vld [vmem:[#allocation2] sm:$0xff]
    %v57 = vld [vmem:[#allocation2 + $0x8] sm:$0xff]
    %v58 = vadd.f32 %v56, %v56
    %v59 = vadd.f32 %v57, %v57
    %60 = vst [vmem:[#allocation8] sm:$0xff] %v58
    %61 = vst [vmem:[#allocation8 + $0x8] sm:$0xff] %v59
    %v62 = vld [vmem:[#allocation5] sm:$0xff]
    %v63 = vld [vmem:[#allocation5 + $0x8] sm:$0xff]
    %v64 = vadd.f32 %v62, %v62
    %v65 = vadd.f32 %v63, %v63
    %66 = vst [vmem:[#allocation8 + $0x10] sm:$0xff] %v64
    %67 = vst [vmem:[#allocation8 + $0x18] sm:$0xff] %v65
    %v68 = vld [vmem:[#allocation7] sm:$0xff]
    %v69 = vld [vmem:[#allocation7 + $0x8] sm:$0xff]
    %v70 = vadd.f32 %v68, %v68
    %v71 = vadd.f32 %v69, %v69
    %72 = vst [vmem:[#allocation8 + $0x20] sm:$0xff] %v70
    %73 = vst [vmem:[#allocation8 + $0x28] sm:$0xff] %v71
    // Predicated region
    $region26: #{tpu_custom_call.1} parent=1 // pred_check
      _
    $region27: #{tpu_custom_call.1} parent=1 // pred_check_branch
      %75 = sbr.rel (0) target = $region29
    $region28: #{tpu_custom_call.1} parent=1 // pred_region
      %77 = vsyncadd [#allocation4], 0
      %s79 = sshll.u32 [#allocation8], 4
      %s80 = int_to_ptr.vmem [resolvable:$true] %s79
      %s81 = sshll.u32 %s3, 4
      %s82 = int_to_ptr.hbm [resolvable:$true] %s81
      %84 = dma.vmem_to_hbm [thread:$0]  %s80, 768, %s82, [#allocation4]
    $region29: #{tpu_custom_call.1} parent=1 // pred_fallthru
      _
    // Predicated region
    $region30: #{tpu_custom_call.1} parent=1 // pred_check
      _
    $region31: #{tpu_custom_call.1} parent=1 // pred_check_branch
      %86 = sbr.rel (0) target = $region33
    $region32: #{tpu_custom_call.1} parent=1 // pred_region
      %88 = dma.done [#allocation4], 768
    $region33: #{tpu_custom_call.1} parent=1 // pred_fallthru
      _
    %89 = vsyncpa [#allocation3], 1
    %90 = vsyncpa [#allocation6], 1
    %91 = vsyncpa [#allocation4], 1

</llo_original>
